<compile_context>
chip_gen: v5e
topology: v5e:2x2
jax: 0.10.0
libtpu: 0.0.40
codegen_flags: <defaults>
</compile_context>

<pallas_src>
import jax
import jax.numpy as jnp
from jax.experimental import pallas as pl
from jax.experimental.pallas import tpu as pltpu


def _amf_gather_kernel(idx_ref, ta_ref, tb_ref, out_ref):
    # idx_ref : [2, TB]  int32  row 0 = a indices, row 1 = b indices (lanes)
    # ta_ref  : [Ep, ND] f32    a-side folded table (VMEM-resident)
    # tb_ref  : [Ep, ND] f32    b-side folded table (VMEM-resident)
    # out_ref : [1, TB]  f32    sigmoid outputs (lane-dense store)
    nd = ta_ref.shape[1]
    tb = idx_ref.shape[1]
    idx = idx_ref[...]

    # One-hot selection masks, [ND, TB]: row = drug id, column = batch lane.
    drug_iota = jax.lax.broadcasted_iota(jnp.int32, (nd, tb), 0)
    oh_a = (drug_iota == idx[0:1, :]).astype(jnp.float32)
    oh_b = (drug_iota == idx[1:2, :]).astype(jnp.float32)

    # Fused embedding gathers through the MXU.  Because the Linear weights,
    # emb_b and the bias are folded into the tables as extra rows,
    #   sum_r ta[r, a_l] * tb[r, b_l]  ==  full pre-activation for lane l.
    ga = jnp.dot(ta_ref[...], oh_a, preferred_element_type=jnp.float32)  # [Ep, TB]
    gb = jnp.dot(tb_ref[...], oh_b, preferred_element_type=jnp.float32)  # [Ep, TB]

    pre = jnp.sum(ga * gb, axis=0, keepdims=True)                        # [1, TB]
    out_ref[...] = jax.nn.sigmoid(pre)


def _amf_pair_kernel(idx_ref, score_ref, out_ref):
    # idx_ref   : [2, TB]  int32
    # score_ref : [ND, ND] f32  precomputed pre-activation table (incl. bias)
    # out_ref   : [1, TB]  f32
    nd = score_ref.shape[0]
    tb = idx_ref.shape[1]
    idx = idx_ref[...]

    drug_iota = jax.lax.broadcasted_iota(jnp.int32, (nd, tb), 0)
    oh_a = (drug_iota == idx[0:1, :]).astype(jnp.float32)
    oh_b = (drug_iota == idx[1:2, :]).astype(jnp.float32)

    # Column pick on the MXU (col l = S[:, b_l]), then masked row pick (XLU).
    cols = jnp.dot(score_ref[...], oh_b, preferred_element_type=jnp.float32)  # [ND, TB]
    pre = jnp.sum(oh_a * cols, axis=0, keepdims=True)                         # [1, TB]
    out_ref[...] = jax.nn.sigmoid(pre)


def amf_forward(a_idx, b_idx, params, *, block_rows=1024, use_pair_table=None):
    """Full AMF forward (embedding gather + interaction + linear + sigmoid)
    fused into one Pallas kernel tiled over the batch (batch on the lane axis)."""
    emb = params["emb"].astype(jnp.float32)      # [ND, E]
    emb_b = params["emb_b"].astype(jnp.float32)  # [ND, 1]
    w = params["out_w"].astype(jnp.float32)      # [1, E+1] (PyTorch Linear layout)
    bias = params["out_b"].astype(jnp.float32)   # [1]

    nd, e = emb.shape
    B = int(a_idx.shape[0])

    # Fast path whenever the full ND x ND score table is trivially small.
    if use_pair_table is None:
        use_pair_table = nd * nd * 4 <= (4 << 20)

    # Batch tile on the lane axis: multiple of 128, capped at block_rows, and
    # split so the grid has >= 2 steps when the batch allows it (v7x megacore).
    b_ceil = pl.cdiv(B, 128) * 128
    tb = max(128, (min(block_rows, b_ceil) // 128) * 128)
    if b_ceil // tb < 2 and b_ceil >= 256:
        tb = max(128, ((b_ceil // 2) // 128) * 128)
    b_pad = pl.cdiv(B, tb) * tb
    grid = (b_pad // tb,)

    # Pad with index 0 (a valid row); padded lanes are sliced off below.
    # TODO(synk): out-of-range indices give an all-zero one-hot (bias-only
    # output) instead of erroring like nn.Embedding; clamp/check if untrusted.
    idx = jnp.zeros((2, b_pad), jnp.int32)
    idx = idx.at[0, :B].set(a_idx.astype(jnp.int32))
    idx = idx.at[1, :B].set(b_idx.astype(jnp.int32))

    w_badd = w[0, 0]
    w_mult = w[0, 1:]          # [E]
    bias_s = bias[0]

    if use_pair_table:
        # One-time ND x ND pre-activation table (wrapper-side glue, ~nd^2*4 B).
        score = (emb * w_mult[None, :]) @ emb.T                     # [ND, ND]
        score = (score + w_badd * (emb_b + emb_b.T) + bias_s).astype(jnp.float32)
        kernel = _amf_pair_kernel
        resident_inputs = (score,)
        resident_specs = [pl.BlockSpec((nd, nd), lambda i: (0, 0))]
    else:
        # General path: per-side folded tables, rows padded to a multiple of 8.
        ones = jnp.ones((1, nd), jnp.float32)
        eb_row = (emb_b[:, 0] * w_badd)[None, :]                    # [1, ND]
        tab_a = jnp.concatenate([emb.T, eb_row, ones, bias_s * ones], axis=0)
        tab_b = jnp.concatenate([emb.T * w_mult[:, None], ones, eb_row, ones], axis=0)
        ep = pl.cdiv(e + 3, 8) * 8
        pad_rows = ep - (e + 3)
        if pad_rows:
            zpad = jnp.zeros((pad_rows, nd), jnp.float32)
            tab_a = jnp.concatenate([tab_a, zpad], axis=0)
            tab_b = jnp.concatenate([tab_b, zpad], axis=0)
        kernel = _amf_gather_kernel
        resident_inputs = (tab_a, tab_b)
        resident_specs = [pl.BlockSpec((ep, nd), lambda i: (0, 0)),
                          pl.BlockSpec((ep, nd), lambda i: (0, 0))]
        # TODO(synk): for drug tables >> VMEM switch this one-hot MXU gather to
        # a manual DMA gather (memory_space=pl.ANY + make_async_copy).

    out = pl.pallas_call(
        kernel,
        out_shape=jax.ShapeDtypeStruct((1, b_pad), jnp.float32),
        grid_spec=pltpu.PrefetchScalarGridSpec(
            num_scalar_prefetch=0,
            grid=grid,
            in_specs=[pl.BlockSpec((2, tb), lambda i: (0, i))] + resident_specs,
            out_specs=pl.BlockSpec((1, tb), lambda i: (0, i)),
        ),
        compiler_params=pltpu.CompilerParams(
            # batch axis is embarrassingly parallel -> megacore sharding on v7x
            dimension_semantics=("parallel",),
        ),
    )(idx, *resident_inputs)

    return out.reshape(b_pad, 1)[:B]


def init_params(key, num_of_drugs, emb_size):
    k1, k2, k3, k4 = jax.random.split(key, 4)
    # nn.Embedding default: N(0, 1); nn.Linear default: U(-1/sqrt(fan_in), +).
    emb = jax.random.normal(k1, (num_of_drugs, emb_size), dtype=jnp.float32)
    emb_b = jax.random.normal(k2, (num_of_drugs, 1), dtype=jnp.float32)
    bound = 1.0 / jnp.sqrt(emb_size + 1.0)
    out_w = jax.random.uniform(k3, (1, emb_size + 1), minval=-bound, maxval=bound,
                               dtype=jnp.float32)
    out_b = jax.random.uniform(k4, (1,), minval=-bound, maxval=bound,
                               dtype=jnp.float32)
    return {"emb": emb, "emb_b": emb_b, "out_w": out_w, "out_b": out_b}


def reference_forward(a_idx, b_idx, params):
    """Pure-JAX reference reproducing the PyTorch forward exactly."""
    emb1 = params["emb"][a_idx]
    emb2 = params["emb"][b_idx]
    b_add = params["emb_b"][a_idx] + params["emb_b"][b_idx]
    mult = emb1 * emb2
    concat = jnp.concatenate([b_add, mult], axis=1)
    out = concat @ params["out_w"].T + params["out_b"]
    return jax.nn.sigmoid(out)


if __name__ == "__main__":
    num_of_drugs = 16
    emb_size = 256        # module default; multiple of 128 for lane alignment
    batch = 200           # not a multiple of the tile -> exercises padding path

    key = jax.random.PRNGKey(0)
    kp, ka, kb = jax.random.split(key, 3)
    params = init_params(kp, num_of_drugs, emb_size)
    a_idx = jax.random.randint(ka, (batch,), 0, num_of_drugs, dtype=jnp.int32)
    b_idx = jax.random.randint(kb, (batch,), 0, num_of_drugs, dtype=jnp.int32)

    ref = reference_forward(a_idx, b_idx, params)

    # Fast path (precomputed ND x ND score table) — the default for tiny ND.
    out_fast = jax.block_until_ready(
        amf_forward(a_idx, b_idx, params, use_pair_table=True))
    # General path (folded-table one-hot MXU gather) — exercised explicitly.
    out_gen = jax.block_until_ready(
        amf_forward(a_idx, b_idx, params, use_pair_table=False))

    assert out_fast.shape == (batch, 1), out_fast.shape
    assert out_gen.shape == (batch, 1), out_gen.shape
    assert jnp.allclose(out_fast, ref, atol=1e-5, rtol=1e-5)
    assert jnp.allclose(out_gen, ref, atol=1e-5, rtol=1e-5)

    print("KERNEL_OK")
</pallas_src>

<mosaic_0001>
module attributes {stable_mosaic.version = 11 : i64} {
  func.func @_amf_pair_kernel(%arg0: i32, %arg1: memref<2x128xi32, #tpu.memory_space<vmem>>, %arg2: memref<16x16xf32, #tpu.memory_space<vmem>>, %arg3: memref<1x128xf32, #tpu.memory_space<vmem>>) attributes {dimension_semantics = [#tpu.dimension_semantics<parallel>], iteration_bounds = array<i64: 2>, scalar_prefetch = 0 : i64, scratch_operands = 0 : i64, tpu.core_type = #tpu.core_type<tc>, window_params = [{transform_indices = @transform_0, window_bounds = array<i64: 2, 128>}, {pipeline_mode = #tpu.pipeline_mode<synchronous>, transform_indices = @transform_1, window_bounds = array<i64: 16, 16>}, {transform_indices = @transform_2, window_bounds = array<i64: 1, 128>}]} {
    %c0 = arith.constant 0 : index
    %c0_0 = arith.constant 0 : index
    %0 = vector.load %arg1[%c0, %c0_0] : memref<2x128xi32, #tpu.memory_space<vmem>>, vector<2x128xi32>
    %1 = tpu.iota {dimensions = array<i32: 0>} : vector<16x128xi32>
    %2 = vector.extract_strided_slice %0 {offsets = [0, 0], sizes = [1, 128], strides = [1, 1]} : vector<2x128xi32> to vector<1x128xi32>
    %3 = vector.broadcast %2 : vector<1x128xi32> to vector<16x128xi32>
    %4 = arith.cmpi eq, %1, %3 : vector<16x128xi32>
    %5 = arith.extui %4 : vector<16x128xi1> to vector<16x128xi32>
    %6 = arith.sitofp %5 : vector<16x128xi32> to vector<16x128xf32>
    %7 = vector.extract_strided_slice %0 {offsets = [1, 0], sizes = [1, 128], strides = [1, 1]} : vector<2x128xi32> to vector<1x128xi32>
    %8 = vector.broadcast %7 : vector<1x128xi32> to vector<16x128xi32>
    %9 = arith.cmpi eq, %1, %8 : vector<16x128xi32>
    %10 = arith.extui %9 : vector<16x128xi1> to vector<16x128xi32>
    %11 = arith.sitofp %10 : vector<16x128xi32> to vector<16x128xf32>
    %c0_1 = arith.constant 0 : index
    %c0_2 = arith.constant 0 : index
    %12 = vector.load %arg2[%c0_1, %c0_2] : memref<16x16xf32, #tpu.memory_space<vmem>>, vector<16x16xf32>
    %cst = arith.constant dense<0.000000e+00> : vector<16x128xf32>
    %13 = tpu.matmul %12, %11, %cst {dimension_numbers = #tpu.dot_dimension_numbers<[1], [0], [0], [1], [0, 0, 1, 1], [], []>} : vector<16x16xf32>, vector<16x128xf32>, vector<16x128xf32> -> vector<16x128xf32>
    %14 = arith.mulf %6, %13 : vector<16x128xf32>
    %cst_3 = arith.constant dense<0.000000e+00> : vector<128xf32>
    %15 = vector.multi_reduction <add>, %14, %cst_3 [0] : vector<16x128xf32> to vector<128xf32>
    %16 = vector.shape_cast %15 : vector<128xf32> to vector<1x128xf32>
    %17 = arith.negf %16 : vector<1x128xf32>
    %18 = math.exp %17 : vector<1x128xf32>
    %cst_4 = arith.constant 1.000000e+00 : f32
    %19 = vector.broadcast %cst_4 : f32 to vector<1x128xf32>
    %20 = arith.addf %19, %18 : vector<1x128xf32>
    %21 = arith.divf %19, %20 : vector<1x128xf32>
    %c0_5 = arith.constant 0 : index
    %c0_6 = arith.constant 0 : index
    %22 = vector.load %arg3[%c0_5, %c0_6] : memref<1x128xf32, #tpu.memory_space<vmem>>, vector<1x128xf32>
    tpu.vector_store %arg3[%c0_5, %c0_6], %21 {strides = array<i32>} : memref<1x128xf32, #tpu.memory_space<vmem>>, vector<1x128xf32>,
    return
  }
  func.func @transform_0(%arg0: i32) -> (i32, i32) {
    %c0_i32 = arith.constant 0 : i32
    %c0_i32_0 = arith.constant 0 : i32
    return %c0_i32, %arg0 : i32, i32
  }
  func.func @transform_1(%arg0: i32) -> (i32, i32) {
    %c0_i32 = arith.constant 0 : i32
    %c0_i32_0 = arith.constant 0 : i32
    %c0_i32_1 = arith.constant 0 : i32
    return %c0_i32, %c0_i32_0 : i32, i32
  }
  func.func @transform_2(%arg0: i32) -> (i32, i32) {
    %c0_i32 = arith.constant 0 : i32
    %c0_i32_0 = arith.constant 0 : i32
    return %c0_i32, %arg0 : i32, i32
  }
}

</mosaic_0001>

<llo_original>
// kernel: tpu_custom_call.1
$region0: #{tpu_custom_call.1}
  #allocation0 [shape = 'u32[]', space=smem, size = 0x4, offset = 0x4, fixed_abs, tag = 'smem constant byte address 0x4 - core index']
  #allocation1 [shape = 'u32[72,128]{1,0:T(1,128)}', space=vmem, size = 0x9000, scoped, tag = 'internal scratch']
  %s0 = inlined_call_operand.hbm [shape: s32[2,256], index: 0, kind: input, shape index: {}]
  %s1 = inlined_call_operand.hbm [shape: f32[16,16], index: 1, kind: input, shape index: {}]
  %s2 = inlined_call_operand.hbm [shape: f32[1,256], index: 2, kind: output, shape index: {}]
  %s3 = sld [smem:[#allocation0]]
  $region49: #{tpu_custom_call.1} parent=0
    _
  %s5 = ssub.s32 1, %s3
  %s6 = scalar_select 0, %s5, %s3
  $region1: #{tpu_custom_call.1} parent=0
    #allocation2 [shape = 'u8[2048]{0}', space=vmem, size = 0x800, scoped, tag = 'input window, operand 0']
    #allocation3 [shape = 's32[2]{0}', space=sflag, size = 0x8, scoped, tag = 'scoped memory for tpu_custom_call.1']
    #allocation4 [shape = 's32[2]{0}', space=sflag, size = 0x8, scoped, tag = 'scoped memory for tpu_custom_call.1']
    #allocation5 [shape = 'u8[8192]{0}', space=vmem, size = 0x2000, scoped, tag = 'input window, operand 1, single buffered']
    #allocation6 [shape = 's32[1]{0}', space=sflag, size = 0x4, scoped, tag = 'scoped memory for tpu_custom_call.1']
    #allocation7 [shape = 'u8[1024]{0}', space=vmem, size = 0x400, scoped, tag = 'output window, operand 0']
    %7 = vsyncpa [#allocation3], 0
    %s8 = scalar_lea.sflag [#allocation3], 1
    %9 = vsyncpa %s8, 0
    %10 = vsyncpa [#allocation6], 0
    %11 = vsyncpa [#allocation4], 0
    %s12 = scalar_lea.sflag [#allocation4], 1
    %13 = vsyncpa %s12, 0
    loop: start=0, step=1, limit=4
    $region2: #{tpu_custom_call.1} parent=1 // loop_pre_header
      _
    $region3: #{tpu_custom_call.1} parent=1 // loop_header
      %s15 = sphi 0, %s19
      %p16 = scmp.ge.s32.totalorder %s15, 4
      %s25 = sphi 0, %s27
      %s28 = sphi 0, %s25
      %s29 = sphi 0, %s28
      %s45 = sphi 0, %s29
      %s49 = sphi 0, %s49
      %s51 = sphi 0, %s49
      %s52 = sphi 0, %s51
      %s66 = sphi 0, %s52
      %s72 = sphi 0, %s74
      %s75 = sphi 0, %s72
      %s76 = sphi 0, %s75
      %s92 = sphi 0, %s76
    $region4: #{tpu_custom_call.1} parent=1 // loop_header_branch
      %18 = sbr.rel (%p16) target = $region8
    $region5: #{tpu_custom_call.1} parent=1 // loop_body
      %s20 = ssub.s32 %s15, 1
      %s21 = ssub.s32 %s15, 2
      %s22 = sadd.s32 %s15, 1
      %s23 = ssub.s32 %s15, %s22
      %p24 = scmp.eq.s32.totalorder %s23, 0
      %s26 = sadd.s32 %s25, 1
      %s27 = scalar_select %p24, %s25, %s26
      %p30 = pneg %p24
      %p31 = scmp.eq.s32.totalorder %s15, 1
      %p32 = por %p30, %p31
      %p33 = scmp.ne.s32.totalorder %s25, %s28
      %p34 = scmp.eq.s32.totalorder %s15, 0
      %p35 = por %p33, %p34
      %p36 = scmp.ne.s32.totalorder %s25, %s28
      %p37 = scmp.eq.s32.totalorder %s20, 1
      %p38 = por %p36, %p37
      %p39 = scmp.ne.s32.totalorder %s28, %s29
      %p40 = scmp.eq.s32.totalorder %s20, 0
      %p41 = por %p39, %p40
      %p42 = scmp.ne.s32.totalorder %s28, %s29
      %p43 = scmp.eq.s32.totalorder %s21, 1
      %p44 = por %p42, %p43
      %p46 = scmp.ne.s32.totalorder %s29, %s45
      %p47 = scmp.eq.s32.totalorder %s21, 0
      %p48 = por %p46, %p47
      %s50 = sadd.s32 %s49, 1
      %p53 = scmp.eq.s32.totalorder %s15, 1
      %p54 = scmp.ne.s32.totalorder %s49, %s51
      %p55 = scmp.eq.s32.totalorder %s15, 0
      %p56 = por %p54, %p55
      %p57 = scmp.ne.s32.totalorder %s49, %s51
      %p58 = scmp.eq.s32.totalorder %s20, 1
      %p59 = por %p57, %p58
      %p60 = scmp.ne.s32.totalorder %s51, %s52
      %p61 = scmp.eq.s32.totalorder %s20, 0
      %p62 = por %p60, %p61
      %p63 = scmp.ne.s32.totalorder %s51, %s52
      %p64 = scmp.eq.s32.totalorder %s21, 1
      %p65 = por %p63, %p64
      %p67 = scmp.ne.s32.totalorder %s52, %s66
      %p68 = scmp.eq.s32.totalorder %s21, 0
      %p69 = por %p67, %p68
      %s70 = ssub.s32 %s15, %s22
      %p71 = scmp.eq.s32.totalorder %s70, 0
      %s73 = sadd.s32 %s72, 1
      %s74 = scalar_select %p71, %s72, %s73
      %p77 = pneg %p71
      %p78 = scmp.eq.s32.totalorder %s15, 1
      %p79 = por %p77, %p78
      %p80 = scmp.ne.s32.totalorder %s72, %s75
      %p81 = scmp.eq.s32.totalorder %s15, 0
      %p82 = por %p80, %p81
      %p83 = scmp.ne.s32.totalorder %s72, %s75
      %p84 = scmp.eq.s32.totalorder %s20, 1
      %p85 = por %p83, %p84
      %p86 = scmp.ne.s32.totalorder %s75, %s76
      %p87 = scmp.eq.s32.totalorder %s20, 0
      %p88 = por %p86, %p87
      %p89 = scmp.ne.s32.totalorder %s75, %s76
      %p90 = scmp.eq.s32.totalorder %s21, 1
      %p91 = por %p89, %p90
      %p93 = scmp.ne.s32.totalorder %s76, %s92
      %p94 = scmp.eq.s32.totalorder %s21, 0
      %p95 = por %p93, %p94
      %p96 = scmp.le.s32.totalorder 1, %s15
      %p97 = scmp.lt.s32.totalorder %s15, 3
      %p98 = pnand %p96, %p97
      %p99 = pneg %p98
      // Predicated region
      $region9: #{tpu_custom_call.1} parent=5 // pred_check
        _
      $region10: #{tpu_custom_call.1} parent=5 // pred_check_branch
        %101 = sbr.rel (%p98) target = $region12
      $region11: #{tpu_custom_call.1} parent=5 // pred_region
        %s102 = ssub.s32 %s15, 1
        // Predicated region
        $region13: #{tpu_custom_call.1} parent=11 // pred_check
          %p103 = pneg %p62
        $region14: #{tpu_custom_call.1} parent=11 // pred_check_branch
          %105 = sbr.rel (%p103) target = $region16
        $region15: #{tpu_custom_call.1} parent=11 // pred_region
          %107 = vsyncadd [#allocation6], 0
          %s108 = sshll.u32 %s1, 4
          %s109 = int_to_ptr.hbm [resolvable:$true] %s108
          %s110 = sshll.u32 [#allocation5], 4
          %s111 = int_to_ptr.vmem [resolvable:$true] %s110
          %116 = dma.hbm_to_vmem [thread:$0]  %s109, 256, %s111, [#allocation6], 128, 128, 8
        $region16: #{tpu_custom_call.1} parent=11 // pred_fallthru
          _
      $region12: #{tpu_custom_call.1} parent=5 // pred_fallthru
        _
      %p117 = scmp.lt.s32.totalorder %s15, 2
      // Predicated region
      $region17: #{tpu_custom_call.1} parent=5 // pred_check
        %p118 = pneg %p117
      $region18: #{tpu_custom_call.1} parent=5 // pred_check_branch
        %120 = sbr.rel (%p118) target = $region20
      $region19: #{tpu_custom_call.1} parent=5 // pred_region
        // Predicated region
        $region21: #{tpu_custom_call.1} parent=19 // pred_check
          %p121 = pneg %p35
        $region22: #{tpu_custom_call.1} parent=19 // pred_check_branch
          %123 = sbr.rel (%p121) target = $region24
        $region23: #{tpu_custom_call.1} parent=19 // pred_region
          %s124 = sand.u32 %s25, 1
          %s125 = scalar_lea.sflag [#allocation3], %s124
          %s126 = sand.u32 %s25, 1
          %s127 = smul.addr %s126, 2
          %s128 = scalar_lea.vmem [#allocation2], %s127
          %130 = vsyncadd %s125, 0
          %s131 = smul.addr %s15, 2
          %s132 = scalar_lea.hbm %s0, %s131
          %s134 = sshll.u32 %s132, 4
          %s135 = int_to_ptr.hbm [resolvable:$true] %s134
          %s136 = sshll.u32 %s128, 4
          %s137 = int_to_ptr.vmem [resolvable:$true] %s136
          %139 = dma.hbm_to_vmem [thread:$0]  %s135, 32, %s137, %s125
        $region24: #{tpu_custom_call.1} parent=19 // pred_fallthru
          _
      $region20: #{tpu_custom_call.1} parent=5 // pred_fallthru
        _
      %p140 = scmp.le.s32.totalorder 1, %s15
      %p141 = scmp.lt.s32.totalorder %s15, 3
      %p142 = pnand %p140, %p141
      %p143 = pneg %p142
      // Predicated region
      $region25: #{tpu_custom_call.1} parent=5 // pred_check
        _
      $region26: #{tpu_custom_call.1} parent=5 // pred_check_branch
        %145 = sbr.rel (%p142) target = $region28
      $region27: #{tpu_custom_call.1} parent=5 // pred_region
        %s146 = ssub.s32 %s15, 1
        %s147 = sand.u32 %s28, 1
        %s148 = scalar_lea.sflag [#allocation3], %s147
        %s149 = sand.u32 %s28, 1
        %s150 = smul.addr %s149, 2
        %s151 = scalar_lea.vmem [#allocation2], %s150
        // Predicated region
        $region29: #{tpu_custom_call.1} parent=27 // pred_check
          %p152 = pneg %p41
        $region30: #{tpu_custom_call.1} parent=27 // pred_check_branch
          %154 = sbr.rel (%p152) target = $region32
        $region31: #{tpu_custom_call.1} parent=27 // pred_region
          %156 = dma.done %s148, 32
        $region32: #{tpu_custom_call.1} parent=27 // pred_fallthru
          _
        // Predicated region
        $region33: #{tpu_custom_call.1} parent=27 // pred_check
          %p157 = pneg %p62
        $region34: #{tpu_custom_call.1} parent=27 // pred_check_branch
          %159 = sbr.rel (%p157) target = $region36
        $region35: #{tpu_custom_call.1} parent=27 // pred_region
          %161 = dma.done [#allocation6], 256
        $region36: #{tpu_custom_call.1} parent=27 // pred_fallthru
          _
        %s162 = sand.u32 %s28, 1
        %s163 = scalar_lea.sflag [#allocation3], %s162
        %s164 = sand.u32 %s28, 1
        %s165 = smul.addr %s164, 2
        %s166 = scalar_lea.vmem [#allocation2], %s165
        %p167 = pneg %p41
        %p168 = pneg %p38
        %p169 = pneg %p62
        %p170 = pneg %p59
        %p171 = pneg %p88
        %p172 = pneg %p85
        %s173 = sand.u32 %s75, 1
        %s174 = scalar_lea.sflag [#allocation4], %s173
        %s175 = sand.u32 %s75, 1
        %s176 = scalar_lea.vmem [#allocation7], %s175
        %v177 = vld [vmem:[%s151] sm:$0x3]
        %v178 = vlaneseq
        %v179 = vshrl.u32 %v178, 7
        %v180 = vadd.s32 %v179, 8
        %v181 = vperm.slane %v177, 0
        %vm182 = vcmp.eq.s32.totalorder %v179, %v181
        %vm183 = vcmp.eq.s32.totalorder %v180, %v181
        %v184 = vsel %vm182, 1, 0
        %v185 = vsel %vm183, 1, 0
        %v186 = vcvt.s32.f32 %v184
        %v187 = vcvt.s32.f32 %v185
        %v188 = vperm.slane %v177, 1
        %vm189 = vcmp.eq.s32.totalorder %v179, %v188
        %vm190 = vcmp.eq.s32.totalorder %v180, %v188
        %v191 = vsel %vm189, 1, 0
        %v192 = vsel %vm190, 1, 0
        %v193 = vcvt.s32.f32 %v191
        %v194 = vcvt.s32.f32 %v192
        %v195 = vld [vmem:[#allocation5] sm:$0xff]
        %v196 = vld [vmem:[#allocation5 + $0x8] sm:$0xff]
        %vm197 = vcmask 130048
        %v199 = vsel %vm197, %v195, 0
        %v202 = vsel %vm197, %v196, 0
        %204 = vmatpush.msra.mxu0 0.0
        %205 = vmatpush.msra.mxu0 0.0
        %206 = vmatpush.msra.mxu0 0.0
        %207 = vmatpush.msra.mxu0 0.0
        %208 = vmatpush.msra.mxu0 0.0
        %209 = vmatpush.msra.mxu0 0.0
        %210 = vmatpush.msra.mxu0 0.0
        %211 = vmatpush.msra.mxu0 0.0
        %212 = vmatpush.msra.mxu0 0.0
        %213 = vmatpush.msra.mxu0 0.0
        %214 = vmatpush.msra.mxu0 0.0
        %215 = vmatpush.msra.mxu0 0.0
        %216 = vmatpush.msra.mxu0 0.0
        %217 = vmatpush.msra.mxu0 0.0
        %218 = vmatpush.msra.mxu0 %v194
        %219 = vmatpush.msra.mxu0 %v193
        %220 = vmatmul.f32.gmra.mxu0 %v199
        %v221 = vpop.f32.mrf.mxu0
        %v222 = vadd.f32 0.0, %v221
        %223 = vmatmul.f32.gmra.mxu0 %v202
        %v224 = vpop.f32.mrf.mxu0
        %v225 = vadd.f32 0.0, %v224
        %226 = vdwg.mxu0
        %v227 = vmul.f32 %v186, %v222
        %v228 = vmul.f32 %v187, %v225
        %v229 = vadd.f32 %v227, %v228
        %v230 = vrot.slane %v229, 4
        %v231 = vadd.f32 %v229, %v230
        %v232 = vrot.slane %v231, 2
        %v233 = vadd.f32 %v231, %v232
        %v234 = vrot.slane %v233, 1
        %v235 = vadd.f32 %v233, %v234
        %v236 = vxor.u32 %v235, 2147483648
        %v237 = vmul.f32 %v236, 1.442695
        %v238 = vpow.pop %v237
        %v239 = vadd.f32 %v238, 1.0
        %v240 = vrcp.pop %v239
        %v241 = vmul.f32 %v239, %v240
        %v242 = vsub.f32 1.0, %v241
        %v243 = vmul.f32 %v240, %v242
        %v244 = vadd.f32 %v240, %v243
        %vm245 = vweird.f32 %v239
        %vm246 = vweird.f32 %v240
        %vm247 = vmor %vm245, %vm246
        %v248 = vsel %vm247, %v240, %v244
        %v249 = vand.u32 2147483647, %v239
        %vm250 = vcmp.eq.f32.partialorder %v249, 8.507059e+37
        %v251 = vand.u32 %v239, 2147483648
        %v252 = vor.u32 1.1754944e-38, %v251
        %v253 = vsel %vm250, %v252, %v248
        %v254 = vmul.f32 1.0, %v253
        %255 = vst [vmem:[%s176] sm:$0x1] %v254
        %s256 = sand.u32 %s75, 1
        %s257 = scalar_lea.sflag [#allocation4], %s256
        %s258 = sand.u32 %s75, 1
        %s259 = scalar_lea.vmem [#allocation7], %s258
        // Predicated region
        $region37: #{tpu_custom_call.1} parent=27 // pred_check
          %p260 = pneg %p85
        $region38: #{tpu_custom_call.1} parent=27 // pred_check_branch
          %262 = sbr.rel (%p260) target = $region40
        $region39: #{tpu_custom_call.1} parent=27 // pred_region
          %264 = vsyncadd %s257, 0
          %s265 = scalar_lea.hbm %s2, %s20
          %s267 = sshll.u32 %s259, 4
          %s268 = int_to_ptr.vmem [resolvable:$true] %s267
          %s269 = sshll.u32 %s265, 4
          %s270 = int_to_ptr.hbm [resolvable:$true] %s269
          %272 = dma.vmem_to_hbm [thread:$0]  %s268, 16, %s270, %s257
        $region40: #{tpu_custom_call.1} parent=27 // pred_fallthru
          _
      $region28: #{tpu_custom_call.1} parent=5 // pred_fallthru
        _
      %p273 = scmp.le.s32.totalorder 2, %s15
      // Predicated region
      $region41: #{tpu_custom_call.1} parent=5 // pred_check
        %p274 = pneg %p273
      $region42: #{tpu_custom_call.1} parent=5 // pred_check_branch
        %276 = sbr.rel (%p274) target = $region44
      $region43: #{tpu_custom_call.1} parent=5 // pred_region
        %s277 = ssub.s32 %s15, 2
        // Predicated region
        $region45: #{tpu_custom_call.1} parent=43 // pred_check
          %p278 = pneg %p91
        $region46: #{tpu_custom_call.1} parent=43 // pred_check_branch
          %280 = sbr.rel (%p278) target = $region48
        $region47: #{tpu_custom_call.1} parent=43 // pred_region
          %s281 = sand.u32 %s76, 1
          %s282 = scalar_lea.sflag [#allocation4], %s281
          %s283 = sand.u32 %s76, 1
          %s284 = scalar_lea.vmem [#allocation7], %s283
          %286 = dma.done %s282, 16
        $region48: #{tpu_custom_call.1} parent=43 // pred_fallthru
          _
      $region44: #{tpu_custom_call.1} parent=5 // pred_fallthru
        _
    $region6: #{tpu_custom_call.1} parent=1 // loop_footer
      %s19 = sadd.s32 1, %s15
    $region7: #{tpu_custom_call.1} parent=1 // loop_footer_branch
      %14 = sbr.rel target = $region3
    $region8: #{tpu_custom_call.1} parent=1 // loop_exit
      _
    %287 = vsyncpa [#allocation3], 1
    %s288 = scalar_lea.sflag [#allocation3], 1
    %289 = vsyncpa %s288, 1
    %290 = vsyncpa [#allocation6], 1
    %291 = vsyncpa [#allocation4], 1
    %s292 = scalar_lea.sflag [#allocation4], 1
    %293 = vsyncpa %s292, 1

</llo_original>
